<compile_context>
chip_gen: v5e
topology: v5e:2x2
jax: 0.10.0
libtpu: 0.0.40
codegen_flags: <defaults>
</compile_context>

<pallas_src>
import jax
import jax.numpy as jnp
from jax.experimental import pallas as pl
from jax.experimental.pallas import tpu as pltpu


def _copy_kernel(x_ref, o_ref):
    # Pure vld/vst stream: all slicing is expressed in the BlockSpecs.
    o_ref[...] = x_ref[...]


def _round_up(v: int, m: int) -> int:
    return (v + m - 1) // m * m


def _vmem_capacity_bytes() -> int:
    """Physical VMEM of the attached TPU; conservative fallback if unknown."""
    try:
        cap = int(getattr(pltpu.get_tpu_info(), "vmem_capacity_bytes", 0))
        if cap > 0:
            return cap
    except Exception:
        pass
    return 64 << 20  # assume v7x-sized VMEM when the query is unavailable


_LANE_CAP = 16384             # lane cap when a full output row exceeds the budget
_FORCE_SPLIT_BYTES = 4 << 20  # above this, never leave a (1, 1) grid (v7x: 2 TCs)


def chomp_t(x: jax.Array, t: int) -> jax.Array:
    """Equivalent of torch `x[:, :, 0:-t, :]` for a 4-D (B, C, T, F) tensor."""
    assert x.ndim == 4, "Chomp_T expects a 4-D (B, C, T, F) input"
    B, C, T, F = x.shape
    assert isinstance(t, int) and 0 < t < T, "chomp amount t must be a static int, 0 < t < T"
    T_out = T - t

    # Flatten: element (b, c, tt, f) -> row b*C + c, lane tt*F + f.  Rows kept
    # by the chomp map to the contiguous lane prefix [0, T_out*F) of each row.
    N = B * C
    W_in = T * F
    W_out = T_out * F
    x2 = x.reshape(N, W_in)

    itemsize = jnp.dtype(x.dtype).itemsize
    # Native sublane tile: 8 rows for 4-byte, 16 for 2-byte, 32 for 1-byte
    # dtypes -- keeps interior stores unmasked for packed dtypes.
    sub = max(8, 32 // itemsize)

    # Generation-aware VMEM budgeting.  Live pipeline footprint is
    # 2 (double-buffer) x 2 (in + out) x block_bytes = 4 x block_bytes.
    vmem_cap = _vmem_capacity_bytes()
    if vmem_cap >= (96 << 20):          # v5e / v6e: 128 MiB physical VMEM
        block_budget = 10 << 20         # ~40 MiB live
        vmem_limit = 80 << 20
    else:                               # v7x (or unknown): 64 MiB physical VMEM
        block_budget = 6 << 20          # ~24 MiB live
        vmem_limit = 48 << 20

    # Lane block first (biggest measured lever for store throughput): a
    # multiple of 128, covering the whole output row whenever that fits the
    # block budget with at least one sublane tile of rows, else capped.
    W_out_pad = _round_up(W_out, 128)
    max_L_by_budget = max(128, (block_budget // (sub * itemsize)) // 128 * 128)
    if W_out_pad <= max_L_by_budget:
        L = W_out_pad                   # whole output row in one lane block
    else:
        L = min(_LANE_CAP, max_L_by_budget)

    # Row block: full leading dim when it fits the budget (always a legal block
    # shape), otherwise the largest multiple of the native sublane tile.
    rows_by_budget = block_budget // (L * itemsize)
    if N <= rows_by_budget:
        R = N
    else:
        R = max(sub, (rows_by_budget // sub) * sub)

    grid_r = pl.cdiv(N, R)
    grid_l = pl.cdiv(W_out, L)

    # v7x has 2 TensorCores: never leave a non-trivial copy on a (1, 1) grid.
    total_out_bytes = N * W_out * itemsize
    if grid_r * grid_l == 1 and total_out_bytes > _FORCE_SPLIT_BYTES:
        if N >= 2 * sub:
            R = _round_up((N + 1) // 2, sub)
            grid_r = pl.cdiv(N, R)
        elif W_out > 256:
            L = _round_up((W_out + 1) // 2, 128)
            grid_l = pl.cdiv(W_out, L)

    grid = (grid_r, grid_l)

    # Grid sized by the OUTPUT extent: the chomped tail is never read.
    # Identical index maps for in/out keep lane offsets aligned, so every valid
    # output element copies the matching (always valid) input element.  The
    # edge lane block may overhang W_out (and, when t*F is smaller than the
    # 128-padding, even W_in); that is safe HERE because Pallas pads
    # out-of-range BlockSpec reads and masks the out-of-range output stores.
    # NOTE: do NOT port this block math unchanged to a manual pl.ANY +
    # make_async_copy variant -- a manual DMA must clamp the source lane slice
    # to [0, W_out) explicitly.
    #
    # TODO(synk): for multi-hundred-MB inputs, a direct HBM->HBM strided-DMA
    # variant (memory_space=pl.ANY on both sides + a few pltpu.make_async_copy
    # row-chunk descriptors) would remove the VMEM bounce and per-step grid
    # overhead entirely; the tiled path is kept for the small/medium shapes
    # this module sees.
    out2 = pl.pallas_call(
        _copy_kernel,
        out_shape=jax.ShapeDtypeStruct((N, W_out), x.dtype),
        grid_spec=pltpu.PrefetchScalarGridSpec(
            num_scalar_prefetch=0,
            grid=grid,
            in_specs=[pl.BlockSpec((R, L), lambda i, j: (i, j))],
            out_specs=pl.BlockSpec((R, L), lambda i, j: (i, j)),
        ),
        compiler_params=pltpu.CompilerParams(
            dimension_semantics=("parallel", "parallel"),
            vmem_limit_bytes=vmem_limit,
        ),
        cost_estimate=pl.CostEstimate(
            flops=0,
            transcendentals=0,
            bytes_accessed=2 * N * W_out * itemsize,
        ),
    )(x2)

    return out2.reshape(B, C, T_out, F)


if __name__ == "__main__":
    key = jax.random.PRNGKey(0)
    k0, k1, k2, k3, k4 = jax.random.split(key, 5)

    # Primary check: small shapes implied by the module.
    B, C, T, F = 2, 4, 16, 16
    t = 3  # Chomp_T(t=3)
    x = jax.random.normal(k0, (B, C, T, F), dtype=jnp.float32)
    out = jax.block_until_ready(chomp_t(x, t))
    ref = x[:, :, 0:-t, :]
    assert out.shape == (B, C, T - t, F), out.shape
    assert out.dtype == x.dtype
    assert jnp.array_equal(out, ref), "Pallas chomp output mismatch (primary)"

    # Lane-padded edge handling at a wider row (W_out not a multiple of lane tile math).
    x1 = jax.random.normal(k1, (2, 4, 72, 128), dtype=jnp.float32)
    out1 = jax.block_until_ready(chomp_t(x1, 5))
    assert jnp.array_equal(out1, x1[:, :, 0:-5, :]), "Pallas chomp mismatch (edge block)"

    # Multi-block grid: W_out too wide for a single budgeted block.
    x2 = jax.random.normal(k2, (4, 8, 600, 256), dtype=jnp.float32)
    out2 = jax.block_until_ready(chomp_t(x2, 8))
    assert jnp.array_equal(out2, x2[:, :, 0:-8, :]), "Pallas chomp mismatch (multi-block)"

    # bf16: exercises the 16-row native sublane tile path.
    x3 = jax.random.normal(k3, (4, 8, 40, 128), dtype=jnp.bfloat16)
    out3 = jax.block_until_ready(chomp_t(x3, 7))
    assert jnp.array_equal(out3, x3[:, :, 0:-7, :]), "Pallas chomp mismatch (bf16)"

    # ~8 MiB output: exercises the "never a (1,1) grid" forced split / row tiling.
    x4 = jax.random.normal(k4, (8, 16, 130, 128), dtype=jnp.float32)
    out4 = jax.block_until_ready(chomp_t(x4, 2))
    assert jnp.array_equal(out4, x4[:, :, 0:-2, :]), "Pallas chomp mismatch (forced split)"

    print("KERNEL_OK")
</pallas_src>

<mosaic_0001>
module attributes {stable_mosaic.version = 11 : i64} {
  func.func @_copy_kernel(%arg0: i32, %arg1: i32, %arg2: memref<8x256xf32, #tpu.memory_space<vmem>>, %arg3: memref<8x256xf32, #tpu.memory_space<vmem>>) attributes {dimension_semantics = [#tpu.dimension_semantics<parallel>, #tpu.dimension_semantics<parallel>], iteration_bounds = array<i64: 1, 1>, scalar_prefetch = 0 : i64, scratch_operands = 0 : i64, tpu.core_type = #tpu.core_type<tc>, window_params = [{transform_indices = @transform_0, window_bounds = array<i64: 8, 256>}, {transform_indices = @transform_1, window_bounds = array<i64: 8, 256>}]} {
    %c0 = arith.constant 0 : index
    %c0_0 = arith.constant 0 : index
    %0 = vector.load %arg2[%c0, %c0_0] : memref<8x256xf32, #tpu.memory_space<vmem>>, vector<8x256xf32>
    %c0_1 = arith.constant 0 : index
    %c0_2 = arith.constant 0 : index
    %1 = vector.load %arg3[%c0_1, %c0_2] : memref<8x256xf32, #tpu.memory_space<vmem>>, vector<8x256xf32>
    tpu.vector_store %arg3[%c0_1, %c0_2], %0 {strides = array<i32>} : memref<8x256xf32, #tpu.memory_space<vmem>>, vector<8x256xf32>,
    return
  }
  func.func @transform_0(%arg0: i32, %arg1: i32) -> (i32, i32) {
    %c0_i32 = arith.constant 0 : i32
    return %arg0, %arg1 : i32, i32
  }
  func.func @transform_1(%arg0: i32, %arg1: i32) -> (i32, i32) {
    %c0_i32 = arith.constant 0 : i32
    return %arg0, %arg1 : i32, i32
  }
}

</mosaic_0001>

<llo_original>
// kernel: tpu_custom_call.1
$region0: #{tpu_custom_call.1}
  #allocation0 [shape = 'u32[]', space=smem, size = 0x4, offset = 0x4, fixed_abs, tag = 'smem constant byte address 0x4 - core index']
  #allocation1 [shape = 'u32[72,128]{1,0:T(1,128)}', space=vmem, size = 0x9000, scoped, tag = 'internal scratch']
  %s0 = inlined_call_operand.hbm [shape: f32[8,256], index: 0, kind: input, shape index: {}]
  %s1 = inlined_call_operand.hbm [shape: f32[8,208], index: 1, kind: output, shape index: {}]
  %s2 = sld [smem:[#allocation0]]
  $region18: #{tpu_custom_call.1} parent=0
    _
  %s4 = ssub.s32 1, %s2
  %s5 = scalar_select 0, %s4, %s2
  $region1: #{tpu_custom_call.1} parent=0
    #allocation2 [shape = 'u8[8192]{0}', space=vmem, size = 0x2000, scoped, tag = 'input window, operand 0, single buffered']
    #allocation3 [shape = 's32[1]{0}', space=sflag, size = 0x4, scoped, tag = 'scoped memory for tpu_custom_call.1']
    #allocation4 [shape = 's32[1]{0}', space=sflag, size = 0x4, scoped, tag = 'scoped memory for tpu_custom_call.1']
    #allocation5 [shape = 'u8[8192]{0}', space=vmem, size = 0x2000, scoped, tag = 'output window, operand 0, single buffered']
    %6 = vsyncpa [#allocation3], 0
    %7 = vsyncpa [#allocation4], 0
    // Predicated region
    $region2: #{tpu_custom_call.1} parent=1 // pred_check
      _
    $region3: #{tpu_custom_call.1} parent=1 // pred_check_branch
      %9 = sbr.rel (0) target = $region5
    $region4: #{tpu_custom_call.1} parent=1 // pred_region
      %11 = vsyncadd [#allocation3], 0
      %s13 = sshll.u32 %s0, 4
      %s14 = int_to_ptr.hbm [resolvable:$true] %s13
      %s15 = sshll.u32 [#allocation2], 4
      %s16 = int_to_ptr.vmem [resolvable:$true] %s15
      %18 = dma.hbm_to_vmem [thread:$0]  %s14, 256, %s16, [#allocation3]
    $region5: #{tpu_custom_call.1} parent=1 // pred_fallthru
      _
    // Predicated region
    $region6: #{tpu_custom_call.1} parent=1 // pred_check
      _
    $region7: #{tpu_custom_call.1} parent=1 // pred_check_branch
      %20 = sbr.rel (0) target = $region9
    $region8: #{tpu_custom_call.1} parent=1 // pred_region
      %22 = dma.done [#allocation3], 256
    $region9: #{tpu_custom_call.1} parent=1 // pred_fallthru
      _
    %v23 = vld [vmem:[#allocation2] sm:$0xff]
    %v24 = vld [vmem:[#allocation2 + $0x8] sm:$0xff]
    %25 = vst [vmem:[#allocation5] sm:$0xff] %v23
    %26 = vst [vmem:[#allocation5 + $0x8] sm:$0xff] %v24
    // Predicated region
    $region10: #{tpu_custom_call.1} parent=1 // pred_check
      _
    $region11: #{tpu_custom_call.1} parent=1 // pred_check_branch
      %28 = sbr.rel (0) target = $region13
    $region12: #{tpu_custom_call.1} parent=1 // pred_region
      %30 = vsyncadd [#allocation4], 0
      %s32 = sshll.u32 [#allocation5], 4
      %s33 = int_to_ptr.vmem [resolvable:$true] %s32
      %s34 = sshll.u32 %s1, 4
      %s35 = int_to_ptr.hbm [resolvable:$true] %s34
      %37 = dma.vmem_to_hbm [thread:$0]  %s33, 256, %s35, [#allocation4]
    $region13: #{tpu_custom_call.1} parent=1 // pred_fallthru
      _
    // Predicated region
    $region14: #{tpu_custom_call.1} parent=1 // pred_check
      _
    $region15: #{tpu_custom_call.1} parent=1 // pred_check_branch
      %39 = sbr.rel (0) target = $region17
    $region16: #{tpu_custom_call.1} parent=1 // pred_region
      %41 = dma.done [#allocation4], 256
    $region17: #{tpu_custom_call.1} parent=1 // pred_fallthru
      _
    %42 = vsyncpa [#allocation3], 1
    %43 = vsyncpa [#allocation4], 1

</llo_original>
